<compile_context>
chip_gen: v6e
topology: v6e:2x2x1
jax: 0.10.0
libtpu: 0.0.40
codegen_flags: <defaults>
</compile_context>

<pallas_src>
import functools

import jax
import jax.numpy as jnp
from jax.experimental import pallas as pl
from jax.experimental.pallas import tpu as pltpu


# --------------------------------------------------------------------------
# Kernel: one (H, W) channel plane per grid step, running sums in SMEM.
# --------------------------------------------------------------------------
def _l2_loss_kernel(x_ref, o_ref, acc_ref, *, inv_count_h, inv_count_w, scale):
    # x_ref  : (H, W)  f32   one channel plane of one image (N, C dims squeezed)
    # o_ref  : (1, 1)  f32   final scalar loss (written on the last step only)
    # acc_ref: (2,)    f32   SMEM scratch: [sum of H-diffs^2, sum of W-diffs^2]
    n = pl.program_id(0)
    c = pl.program_id(1)
    is_first = jnp.logical_and(n == 0, c == 0)
    is_last = jnp.logical_and(n == pl.num_programs(0) - 1,
                              c == pl.num_programs(1) - 1)

    @pl.when(is_first)
    def _():
        acc_ref[0] = 0.0
        acc_ref[1] = 0.0

    x = x_ref[...]                       # (H, W): H on sublanes, W on lanes
    dh = x[1:, :] - x[:-1, :]            # diff along H
    dw = x[:, 1:] - x[:, :-1]            # diff along W
    acc_ref[0] += jnp.sum(dh * dh)
    acc_ref[1] += jnp.sum(dw * dw)

    @pl.when(is_last)
    def _():
        loss = scale * (acc_ref[0] * inv_count_h + acc_ref[1] * inv_count_w)
        o_ref[...] = jnp.full((1, 1), loss, dtype=jnp.float32)


def l2_loss(x, l2_loss_weight=1.0):
    """Pallas TPU implementation of L2Loss.forward.  x: (N, C, H, W)."""
    N, C, H, W = x.shape
    count_h = C * (H - 1) * W
    count_w = C * H * (W - 1)

    kernel = functools.partial(
        _l2_loss_kernel,
        inv_count_h=1.0 / float(count_h),
        inv_count_w=1.0 / float(count_w),
        scale=float(l2_loss_weight) * 2.0 / float(N),
    )

    out = pl.pallas_call(
        kernel,
        out_shape=jax.ShapeDtypeStruct((1, 1), jnp.float32),
        grid=(N, C),
        in_specs=[
            # (None, None, H, W): squeeze N and C, kernel sees an (H, W) plane.
            pl.BlockSpec((None, None, H, W), lambda n, c: (n, c, 0, 0)),
        ],
        # Constant block index -> output stays resident across the whole grid;
        # it is only written at the final grid step.
        out_specs=pl.BlockSpec((1, 1), lambda n, c: (0, 0)),
        scratch_shapes=[pltpu.SMEM((2,), jnp.float32)],
        compiler_params=pltpu.CompilerParams(
            # Both axes feed one shared accumulator -> must stay "arbitrary"
            # (megacore-parallel would race on the SMEM scratch).
            dimension_semantics=("arbitrary", "arbitrary"),
        ),
    )(x.astype(jnp.float32))
    return out[0, 0]


# --------------------------------------------------------------------------
# Pure-JAX reference (mirrors the PyTorch module exactly)
# --------------------------------------------------------------------------
def l2_loss_ref(x, l2_loss_weight=1.0):
    x = x.astype(jnp.float32)
    N, C, H, W = x.shape
    count_h = C * (H - 1) * W
    count_w = C * H * (W - 1)
    h_l2 = jnp.sum((x[:, :, 1:, :] - x[:, :, :-1, :]) ** 2)
    w_l2 = jnp.sum((x[:, :, :, 1:] - x[:, :, :, :-1]) ** 2)
    return l2_loss_weight * 2.0 * (h_l2 / count_h + w_l2 / count_w) / N


if __name__ == "__main__":
    key = jax.random.PRNGKey(0)
    # Small, deterministic example consistent with the module (NCHW images).
    # W = 128 keeps the lane axis fully dense; the kernel is correct for any
    # H >= 2, W >= 2 since the block equals the full (H, W) extent.
    N, C, H, W = 2, 3, 64, 128
    x = jax.random.uniform(key, (N, C, H, W), jnp.float32)

    loss = jax.jit(l2_loss)(x)
    jax.block_until_ready(loss)

    ref = l2_loss_ref(x)
    assert loss.shape == () and jnp.isfinite(loss)
    assert jnp.allclose(loss, ref, rtol=1e-5, atol=1e-6), (loss, ref)
    print("KERNEL_OK")
</pallas_src>

<mosaic_0001>
module attributes {stable_mosaic.version = 11 : i64} {
  func.func @_l2_loss_kernel(%arg0: i32, %arg1: i32, %arg2: memref<1x1x64x128xf32, #tpu.memory_space<vmem>>, %arg3: memref<1x1xf32, #tpu.memory_space<vmem>>, %arg4: memref<2xf32, #tpu.memory_space<smem>>) attributes {dimension_semantics = [#tpu.dimension_semantics<arbitrary>, #tpu.dimension_semantics<arbitrary>], iteration_bounds = array<i64: 2, 3>, scalar_prefetch = 0 : i64, scratch_operands = 1 : i64, tpu.core_type = #tpu.core_type<tc>, window_params = [{transform_indices = @transform_0, window_bounds = array<i64: 1, 1, 64, 128>}, {pipeline_mode = #tpu.pipeline_mode<synchronous>, transform_indices = @transform_1, window_bounds = array<i64: 1, 1>}]} {
    %c0_i32 = arith.constant 0 : i32
    %0 = arith.cmpi eq, %arg0, %c0_i32 : i32
    %c0_i32_0 = arith.constant 0 : i32
    %1 = arith.cmpi eq, %arg1, %c0_i32_0 : i32
    %2 = arith.andi %0, %1 : i1
    %c1_i32 = arith.constant 1 : i32
    %3 = arith.cmpi eq, %arg0, %c1_i32 : i32
    %c2_i32 = arith.constant 2 : i32
    %4 = arith.cmpi eq, %arg1, %c2_i32 : i32
    %5 = arith.andi %3, %4 : i1
    %6 = arith.extui %2 : i1 to i32
    %c0_i32_1 = arith.constant 0 : i32
    %7 = arith.cmpi ne, %6, %c0_i32_1 : i32
    scf.if %7 {
      %cst_10 = arith.constant 0.000000e+00 : f32
      %c0_11 = arith.constant 0 : index
      %34 = memref.load %arg4[%c0_11] : memref<2xf32, #tpu.memory_space<smem>>
      memref.store %cst_10, %arg4[%c0_11] : memref<2xf32, #tpu.memory_space<smem>>
      %cst_12 = arith.constant 0.000000e+00 : f32
      %c1_13 = arith.constant 1 : index
      %35 = memref.load %arg4[%c1_13] : memref<2xf32, #tpu.memory_space<smem>>
      memref.store %cst_12, %arg4[%c1_13] : memref<2xf32, #tpu.memory_space<smem>>
    } else {
    }
    %c0 = arith.constant 0 : index
    %c0_2 = arith.constant 0 : index
    %c0_3 = arith.constant 0 : index
    %c0_4 = arith.constant 0 : index
    %8 = vector.load %arg2[%c0, %c0_2, %c0_3, %c0_4] : memref<1x1x64x128xf32, #tpu.memory_space<vmem>>, vector<1x1x64x128xf32>
    %9 = vector.shape_cast %8 : vector<1x1x64x128xf32> to vector<64x128xf32>
    %10 = vector.extract_strided_slice %9 {offsets = [1, 0], sizes = [63, 128], strides = [1, 1]} : vector<64x128xf32> to vector<63x128xf32>
    %11 = vector.extract_strided_slice %9 {offsets = [0, 0], sizes = [63, 128], strides = [1, 1]} : vector<64x128xf32> to vector<63x128xf32>
    %12 = arith.subf %10, %11 : vector<63x128xf32>
    %13 = vector.extract_strided_slice %9 {offsets = [0, 1], sizes = [64, 127], strides = [1, 1]} : vector<64x128xf32> to vector<64x127xf32>
    %14 = vector.extract_strided_slice %9 {offsets = [0, 0], sizes = [64, 127], strides = [1, 1]} : vector<64x128xf32> to vector<64x127xf32>
    %15 = arith.subf %13, %14 : vector<64x127xf32>
    %c0_5 = arith.constant 0 : index
    %16 = memref.load %arg4[%c0_5] : memref<2xf32, #tpu.memory_space<smem>>
    %17 = arith.mulf %12, %12 : vector<63x128xf32>
    %18 = vector.shape_cast %17 : vector<63x128xf32> to vector<1x63x128xf32>
    %cst = arith.constant dense<0.000000e+00> : vector<1xf32>
    %19 = vector.multi_reduction <add>, %18, %cst [1, 2] : vector<1x63x128xf32> to vector<1xf32>
    %20 = vector.shape_cast %19 : vector<1xf32> to vector<1x1x1xf32>
    %21 = vector.extract %20[0, 0, 0] : f32 from vector<1x1x1xf32>
    %22 = arith.addf %16, %21 : f32
    %c0_6 = arith.constant 0 : index
    %23 = memref.load %arg4[%c0_6] : memref<2xf32, #tpu.memory_space<smem>>
    memref.store %22, %arg4[%c0_6] : memref<2xf32, #tpu.memory_space<smem>>
    %c1 = arith.constant 1 : index
    %24 = memref.load %arg4[%c1] : memref<2xf32, #tpu.memory_space<smem>>
    %25 = arith.mulf %15, %15 : vector<64x127xf32>
    %26 = vector.shape_cast %25 : vector<64x127xf32> to vector<1x64x127xf32>
    %cst_7 = arith.constant dense<0.000000e+00> : vector<1xf32>
    %27 = vector.multi_reduction <add>, %26, %cst_7 [1, 2] : vector<1x64x127xf32> to vector<1xf32>
    %28 = vector.shape_cast %27 : vector<1xf32> to vector<1x1x1xf32>
    %29 = vector.extract %28[0, 0, 0] : f32 from vector<1x1x1xf32>
    %30 = arith.addf %24, %29 : f32
    %c1_8 = arith.constant 1 : index
    %31 = memref.load %arg4[%c1_8] : memref<2xf32, #tpu.memory_space<smem>>
    memref.store %30, %arg4[%c1_8] : memref<2xf32, #tpu.memory_space<smem>>
    %32 = arith.extui %5 : i1 to i32
    %c0_i32_9 = arith.constant 0 : i32
    %33 = arith.cmpi ne, %32, %c0_i32_9 : i32
    scf.if %33 {
      %c0_10 = arith.constant 0 : index
      %34 = memref.load %arg4[%c0_10] : memref<2xf32, #tpu.memory_space<smem>>
      %cst_11 = arith.constant 4.13359776E-5 : f32
      %35 = arith.mulf %34, %cst_11 : f32
      %c1_12 = arith.constant 1 : index
      %36 = memref.load %arg4[%c1_12] : memref<2xf32, #tpu.memory_space<smem>>
      %cst_13 = arith.constant 4.101050e-05 : f32
      %37 = arith.mulf %36, %cst_13 : f32
      %38 = arith.addf %35, %37 : f32
      %cst_14 = arith.constant 1.000000e+00 : f32
      %39 = arith.mulf %cst_14, %38 : f32
      %40 = vector.broadcast %39 : f32 to vector<1x1xf32>
      %c0_15 = arith.constant 0 : index
      %c0_16 = arith.constant 0 : index
      %41 = vector.load %arg3[%c0_15, %c0_16] : memref<1x1xf32, #tpu.memory_space<vmem>>, vector<1x1xf32>
      tpu.vector_store %arg3[%c0_15, %c0_16], %40 {strides = array<i32>} : memref<1x1xf32, #tpu.memory_space<vmem>>, vector<1x1xf32>,
    } else {
    }
    return
  }
  func.func @transform_0(%arg0: i32, %arg1: i32) -> (i32, i32, i32, i32) {
    %c0_i32 = arith.constant 0 : i32
    %c0_i32_0 = arith.constant 0 : i32
    %c0_i32_1 = arith.constant 0 : i32
    return %arg0, %arg1, %c0_i32, %c0_i32_0 : i32, i32, i32, i32
  }
  func.func @transform_1(%arg0: i32, %arg1: i32) -> (i32, i32) {
    %c0_i32 = arith.constant 0 : i32
    %c0_i32_0 = arith.constant 0 : i32
    %c0_i32_1 = arith.constant 0 : i32
    return %c0_i32, %c0_i32_0 : i32, i32
  }
}

</mosaic_0001>

<llo_original>
// kernel: l2_loss.1
$region0: #{l2_loss.1}
  #allocation0 [shape = 'u32[]', space=smem, size = 0x4, offset = 0x4, fixed_abs, tag = 'smem constant byte address 0x4 - core index']
  #allocation1 [shape = 'u32[144,128]{1,0:T(1,128)}', space=vmem, size = 0x12000, scoped, tag = 'internal scratch']
  #allocation2 [shape = 'f32[2]{0:T(128)}', space=smem, size = 0x200, scoped, tag = 'scratch operand']
  %s0 = inlined_call_operand.hbm [shape: f32[2,3,64,128], index: 0, kind: input, shape index: {}]
  %s1 = inlined_call_operand.hbm [shape: f32[1,1], index: 1, kind: output, shape index: {}]
  %s2 = sld [smem:[#allocation0]]
  $region49: #{l2_loss.1} parent=0
    _
  %s4 = ssub.s32 1, %s2
  %s5 = scalar_select 0, %s4, %s2
  $region1: #{l2_loss.1} parent=0
    #allocation3 [shape = 'u8[65536]{0}', space=vmem, size = 0x10000, scoped, tag = 'input window, operand 0']
    #allocation4 [shape = 's32[2]{0}', space=sflag, size = 0x8, scoped, tag = 'scoped memory for l2_loss.1']
    #allocation5 [shape = 's32[2]{0}', space=sflag, size = 0x8, scoped, tag = 'scoped memory for l2_loss.1']
    #allocation6 [shape = 'u8[512]{0}', space=vmem, size = 0x400, scoped, tag = 'output window, operand 0, single buffered']
    %6 = vsyncpa [#allocation4], 0
    %s7 = scalar_lea.sflag [#allocation4], 1
    %8 = vsyncpa %s7, 0
    %9 = vsyncpa [#allocation5], 0
    loop: start=0, step=1, limit=8
    $region2: #{l2_loss.1} parent=1 // loop_pre_header
      _
    $region3: #{l2_loss.1} parent=1 // loop_header
      %s11 = sphi 0, %s15
      %p12 = scmp.ge.s32.totalorder %s11, 8
      %s18 = sphi 0, %s30
      %s19 = sphi 0, %s26
      %s20 = sphi 0, %s18
      %s21 = sphi 0, %s19
      %s22 = sphi 0, %s20
      %s23 = sphi 0, %s21
      %s35 = sphi 0, %s37
      %s38 = sphi 0, %s35
      %s39 = sphi 0, %s38
      %s55 = sphi 0, %s39
      %s59 = sphi 0, %s59
      %s61 = sphi 0, %s59
      %s62 = sphi 0, %s61
      %s76 = sphi 0, %s62
    $region4: #{l2_loss.1} parent=1 // loop_header_branch
      %14 = sbr.rel (%p12) target = $region8
    $region5: #{l2_loss.1} parent=1 // loop_body
      %s16 = ssub.s32 %s11, 1
      %s17 = ssub.s32 %s11, 2
      %s24 = sadd.s32 1, %s19
      %p25 = scmp.ge.s32.totalorder %s24, 3
      %s26 = scalar_select %p25, 0, %s24
      %s27 = sadd.s32 1, %s18
      %s28 = scalar_select %p25, %s27, %s18
      %p29 = scmp.ge.s32.totalorder %s28, 2
      %s30 = scalar_select %p29, 0, %s28
      %s31 = ssub.s32 %s18, %s30
      %s32 = ssub.s32 %s19, %s26
      %s33 = sor.u32 %s31, %s32
      %p34 = scmp.eq.s32.totalorder %s33, 0
      %s36 = sadd.s32 %s35, 1
      %s37 = scalar_select %p34, %s35, %s36
      %p40 = pneg %p34
      %p41 = scmp.eq.s32.totalorder %s11, 5
      %p42 = por %p40, %p41
      %p43 = scmp.ne.s32.totalorder %s35, %s38
      %p44 = scmp.eq.s32.totalorder %s11, 0
      %p45 = por %p43, %p44
      %p46 = scmp.ne.s32.totalorder %s35, %s38
      %p47 = scmp.eq.s32.totalorder %s16, 5
      %p48 = por %p46, %p47
      %p49 = scmp.ne.s32.totalorder %s38, %s39
      %p50 = scmp.eq.s32.totalorder %s16, 0
      %p51 = por %p49, %p50
      %p52 = scmp.ne.s32.totalorder %s38, %s39
      %p53 = scmp.eq.s32.totalorder %s17, 5
      %p54 = por %p52, %p53
      %p56 = scmp.ne.s32.totalorder %s39, %s55
      %p57 = scmp.eq.s32.totalorder %s17, 0
      %p58 = por %p56, %p57
      %s60 = sadd.s32 %s59, 1
      %p63 = scmp.eq.s32.totalorder %s11, 5
      %p64 = scmp.ne.s32.totalorder %s59, %s61
      %p65 = scmp.eq.s32.totalorder %s11, 0
      %p66 = por %p64, %p65
      %p67 = scmp.ne.s32.totalorder %s59, %s61
      %p68 = scmp.eq.s32.totalorder %s16, 5
      %p69 = por %p67, %p68
      %p70 = scmp.ne.s32.totalorder %s61, %s62
      %p71 = scmp.eq.s32.totalorder %s16, 0
      %p72 = por %p70, %p71
      %p73 = scmp.ne.s32.totalorder %s61, %s62
      %p74 = scmp.eq.s32.totalorder %s17, 5
      %p75 = por %p73, %p74
      %p77 = scmp.ne.s32.totalorder %s62, %s76
      %p78 = scmp.eq.s32.totalorder %s17, 0
      %p79 = por %p77, %p78
      %p80 = scmp.le.s32.totalorder 1, %s11
      %p81 = scmp.lt.s32.totalorder %s11, 7
      %p82 = pnand %p80, %p81
      %p83 = pneg %p82
      // Predicated region
      $region9: #{l2_loss.1} parent=5 // pred_check
        _
      $region10: #{l2_loss.1} parent=5 // pred_check_branch
        %85 = sbr.rel (%p82) target = $region12
      $region11: #{l2_loss.1} parent=5 // pred_region
        %s86 = ssub.s32 %s11, 1
      $region12: #{l2_loss.1} parent=5 // pred_fallthru
        _
      %p87 = scmp.lt.s32.totalorder %s11, 6
      // Predicated region
      $region13: #{l2_loss.1} parent=5 // pred_check
        %p88 = pneg %p87
      $region14: #{l2_loss.1} parent=5 // pred_check_branch
        %90 = sbr.rel (%p88) target = $region16
      $region15: #{l2_loss.1} parent=5 // pred_region
        // Predicated region
        $region17: #{l2_loss.1} parent=15 // pred_check
          %p91 = pneg %p45
        $region18: #{l2_loss.1} parent=15 // pred_check_branch
          %93 = sbr.rel (%p91) target = $region20
        $region19: #{l2_loss.1} parent=15 // pred_region
          %s94 = sand.u32 %s35, 1
          %s95 = scalar_lea.sflag [#allocation4], %s94
          %s96 = sand.u32 %s35, 1
          %s97 = smul.addr %s96, 64
          %s98 = scalar_lea.vmem [#allocation3], %s97
          %s100 = ssub.s32 1024, 1024
          %101 = vsyncadd %s95, %s100
          %s102 = smul.addr %s19, 8
          %s103 = smul.addr %s18, 24
          %s104 = sadd.s32 %s102, %s103
          %s105 = smul.addr %s104, 128
          %s106 = scalar_lea.hbm %s0, %s105
          %s107 = sshll.u32 %s98, 4
          %s108 = int_to_ptr.vmem [resolvable:$true] %s107
          %113 = dma.hbm_to_vmem [thread:$0]  %s106, 1024, %s108, %s95, 128, 128, 8
        $region20: #{l2_loss.1} parent=15 // pred_fallthru
          _
      $region16: #{l2_loss.1} parent=5 // pred_fallthru
        _
      %p114 = scmp.le.s32.totalorder 1, %s11
      %p115 = scmp.lt.s32.totalorder %s11, 7
      %p116 = pnand %p114, %p115
      %p117 = pneg %p116
      // Predicated region
      $region21: #{l2_loss.1} parent=5 // pred_check
        _
      $region22: #{l2_loss.1} parent=5 // pred_check_branch
        %119 = sbr.rel (%p116) target = $region24
      $region23: #{l2_loss.1} parent=5 // pred_region
        %s120 = ssub.s32 %s11, 1
        %s121 = sand.u32 %s38, 1
        %s122 = scalar_lea.sflag [#allocation4], %s121
        %s123 = sand.u32 %s38, 1
        %s124 = smul.addr %s123, 64
        %s125 = scalar_lea.vmem [#allocation3], %s124
        // Predicated region
        $region25: #{l2_loss.1} parent=23 // pred_check
          %p126 = pneg %p51
        $region26: #{l2_loss.1} parent=23 // pred_check_branch
          %128 = sbr.rel (%p126) target = $region28
        $region27: #{l2_loss.1} parent=23 // pred_region
          %129 = dma.done %s122, 1024
        $region28: #{l2_loss.1} parent=23 // pred_fallthru
          _
        %s130 = sand.u32 %s38, 1
        %s131 = scalar_lea.sflag [#allocation4], %s130
        %s132 = sand.u32 %s38, 1
        %s133 = smul.addr %s132, 64
        %s134 = scalar_lea.vmem [#allocation3], %s133
        %p135 = pneg %p51
        %p136 = pneg %p48
        %p137 = pneg %p72
        %p138 = pneg %p69
        %p139 = scmp.eq.s32.totalorder %s20, 0
        %p140 = scmp.eq.s32.totalorder %s21, 0
        %p141 = pnand %p139, %p140
        %p142 = pneg %p141
        %p143 = scmp.eq.s32.totalorder %s20, 1
        %p144 = scmp.eq.s32.totalorder %s21, 2
        %p145 = pnand %p143, %p144
        %p146 = pneg %p145
        // Predicated region
        $region29: #{l2_loss.1} parent=23 // pred_check
          _
        $region30: #{l2_loss.1} parent=23 // pred_check_branch
          %148 = sbr.rel (%p141) target = $region32
        $region31: #{l2_loss.1} parent=23 // pred_region
          %s149 = scalar_lea.smem [#allocation2], 0
          %150 = sst [smem:[%s149]] 0.0
          %s151 = scalar_lea.smem [#allocation2], 1
          %152 = sst [smem:[%s151]] 0.0
        $region32: #{l2_loss.1} parent=23 // pred_fallthru
          _
        %v153 = vld [vmem:[%s125] sm:$0xff]
        %v154 = vld [vmem:[%s125 + $0x8] sm:$0xff]
        %v155 = vld [vmem:[%s125 + $0x10] sm:$0xff]
        %v156 = vld [vmem:[%s125 + $0x18] sm:$0xff]
        %v157 = vld [vmem:[%s125 + $0x20] sm:$0xff]
        %v158 = vld [vmem:[%s125 + $0x28] sm:$0xff]
        %v159 = vld [vmem:[%s125 + $0x30] sm:$0xff]
        %v160 = vld [vmem:[%s125 + $0x38] sm:$0xff]
        %vm169 = vcmask 1040384
        %v170 = vrot.slane %v153, 7
        %v171 = vrot.slane %v154, 7
        %v172 = vsel %vm169, %v170, %v171
        %v173 = vrot.slane %v155, 7
        %v174 = vsel %vm169, %v171, %v173
        %v175 = vrot.slane %v156, 7
        %v176 = vsel %vm169, %v173, %v175
        %v177 = vrot.slane %v157, 7
        %v178 = vsel %vm169, %v175, %v177
        %v179 = vrot.slane %v158, 7
        %v180 = vsel %vm169, %v177, %v179
        %v181 = vrot.slane %v159, 7
        %v182 = vsel %vm169, %v179, %v181
        %v183 = vrot.slane %v160, 7
        %v184 = vsel %vm169, %v181, %v183
        %v193 = vsub.f32 %v153, %v170
        %v194 = vsub.f32 %v154, %v172
        %v195 = vsub.f32 %v155, %v174
        %v196 = vsub.f32 %v156, %v176
        %v197 = vsub.f32 %v157, %v178
        %v198 = vsub.f32 %v158, %v180
        %v199 = vsub.f32 %v159, %v182
        %v200 = vsub.f32 %v160, %v184
        %201 = vrot.lane.b32.xlu0 %v153, 1
        %v202 = vpop.permute.xlu0 %201
        %203 = vrot.lane.b32.xlu0 %v154, 1
        %v204 = vpop.permute.xlu0 %203
        %205 = vrot.lane.b32.xlu0 %v155, 1
        %v206 = vpop.permute.xlu0 %205
        %207 = vrot.lane.b32.xlu0 %v156, 1
        %v208 = vpop.permute.xlu0 %207
        %209 = vrot.lane.b32.xlu0 %v157, 1
        %v210 = vpop.permute.xlu0 %209
        %211 = vrot.lane.b32.xlu0 %v158, 1
        %v212 = vpop.permute.xlu0 %211
        %213 = vrot.lane.b32.xlu0 %v159, 1
        %v214 = vpop.permute.xlu0 %213
        %215 = vrot.lane.b32.xlu0 %v160, 1
        %v216 = vpop.permute.xlu0 %215
        %v225 = vsub.f32 %v153, %v202
        %v226 = vsub.f32 %v154, %v204
        %v227 = vsub.f32 %v155, %v206
        %v228 = vsub.f32 %v156, %v208
        %v229 = vsub.f32 %v157, %v210
        %v230 = vsub.f32 %v158, %v212
        %v231 = vsub.f32 %v159, %v214
        %v232 = vsub.f32 %v160, %v216
        %s233 = sld [smem:[#allocation2]]
        %v234 = vmul.f32 %v193, %v193
        %v235 = vmul.f32 %v194, %v194
        %v236 = vmul.f32 %v195, %v195
        %v237 = vmul.f32 %v196, %v196
        %v238 = vmul.f32 %v197, %v197
        %v239 = vmul.f32 %v198, %v198
        %v240 = vmul.f32 %v199, %v199
        %v241 = vmul.f32 %v200, %v200
        %vm250 = vcmask 1046528
        %v251 = vrot.slane %v234, 1
        %v252 = vrot.slane %v235, 1
        %v253 = vsel %vm250, %v251, %v252
        %v254 = vrot.slane %v236, 1
        %v255 = vsel %vm250, %v252, %v254
        %v256 = vrot.slane %v237, 1
        %v257 = vsel %vm250, %v254, %v256
        %v258 = vrot.slane %v238, 1
        %v259 = vsel %vm250, %v256, %v258
        %v260 = vrot.slane %v239, 1
        %v261 = vsel %vm250, %v258, %v260
        %v262 = vrot.slane %v240, 1
        %v263 = vsel %vm250, %v260, %v262
        %v264 = vrot.slane %v241, 1
        %v265 = vsel %vm250, %v262, %v264
        %v274 = vadd.f32 %v253, %v255
        %v275 = vadd.f32 %v274, %v257
        %v276 = vadd.f32 %v275, %v259
        %v277 = vadd.f32 %v276, %v261
        %v278 = vadd.f32 %v277, %v263
        %v279 = vadd.f32 %v278, %v265
        %v280 = vsel %vm250, %v264, 0.0
        %v281 = vadd.f32 %v279, %v280
        %282 = vadd.xlane.f32.xlu0 %v281
        %v283 = vpop.xlane.xlu0 %282
        %v284 = vrot.slane %v283, 4
        %v285 = vadd.f32 %v283, %v284
        %v286 = vrot.slane %v285, 2
        %v287 = vadd.f32 %v285, %v286
        %v288 = vrot.slane %v287, 1
        %v289 = vadd.f32 %v287, %v288
        %s290 = vtos %v289
        %s291 = sadd.f32 %s233, %s290
        %s292 = scalar_lea.smem [#allocation2], 0
        %293 = sst [smem:[%s292]] %s291
        %s294 = sld [smem:[#allocation2 + $0x1]]
        %v295 = vmul.f32 %v225, %v225
        %v296 = vmul.f32 %v226, %v226
        %v297 = vmul.f32 %v227, %v227
        %v298 = vmul.f32 %v228, %v228
        %v299 = vmul.f32 %v229, %v229
        %v300 = vmul.f32 %v230, %v230
        %v301 = vmul.f32 %v231, %v231
        %v302 = vmul.f32 %v232, %v232
        %311 = vrot.lane.b32.xlu0 %v295, 127
        %v312 = vpop.permute.xlu0 %311
        %313 = vrot.lane.b32.xlu0 %v296, 127
        %v314 = vpop.permute.xlu0 %313
        %315 = vrot.lane.b32.xlu0 %v297, 127
        %v316 = vpop.permute.xlu0 %315
        %317 = vrot.lane.b32.xlu0 %v298, 127
        %v318 = vpop.permute.xlu0 %317
        %319 = vrot.lane.b32.xlu0 %v299, 127
        %v320 = vpop.permute.xlu0 %319
        %321 = vrot.lane.b32.xlu0 %v300, 127
        %v322 = vpop.permute.xlu0 %321
        %323 = vrot.lane.b32.xlu0 %v301, 127
        %v324 = vpop.permute.xlu0 %323
        %325 = vrot.lane.b32.xlu0 %v302, 127
        %v326 = vpop.permute.xlu0 %325
        %vm335 = vcmask 1039360
        %v336 = vsel %vm335, %v312, 0.0
        %v337 = vsel %vm335, %v314, 0.0
        %v338 = vadd.f32 %v336, %v337
        %v339 = vsel %vm335, %v316, 0.0
        %v340 = vadd.f32 %v338, %v339
        %v341 = vsel %vm335, %v318, 0.0
        %v342 = vadd.f32 %v340, %v341
        %v343 = vsel %vm335, %v320, 0.0
        %v344 = vadd.f32 %v342, %v343
        %v345 = vsel %vm335, %v322, 0.0
        %v346 = vadd.f32 %v344, %v345
        %v347 = vsel %vm335, %v324, 0.0
        %v348 = vadd.f32 %v346, %v347
        %v349 = vsel %vm335, %v326, 0.0
        %v350 = vadd.f32 %v348, %v349
        %351 = vadd.xlane.f32.xlu0 %v350
        %v352 = vpop.xlane.xlu0 %351
        %v353 = vrot.slane %v352, 4
        %v354 = vadd.f32 %v352, %v353
        %v355 = vrot.slane %v354, 2
        %v356 = vadd.f32 %v354, %v355
        %v357 = vrot.slane %v356, 1
        %v358 = vadd.f32 %v356, %v357
        %s359 = vtos %v358
        %s360 = sadd.f32 %s294, %s359
        %s361 = scalar_lea.smem [#allocation2], 1
        %362 = sst [smem:[%s361]] %s360
        // Predicated region
        $region33: #{l2_loss.1} parent=23 // pred_check
          _
        $region34: #{l2_loss.1} parent=23 // pred_check_branch
          %364 = sbr.rel (%p145) target = $region36
        $region35: #{l2_loss.1} parent=23 // pred_region
          %s365 = sld [smem:[#allocation2]]
          %s366 = smul.f32 %s365, 4.1335978e-05
          %s367 = sld [smem:[#allocation2 + $0x1]]
          %s368 = smul.f32 %s367, 4.10105e-05
          %s369 = sadd.f32 %s366, %s368
          %v370 = vstv %s369
          %vm371 = vcmask 0
          %372 = vst.msk [vmem:[#allocation6] sm:$0x1] %vm371, %v370
        $region36: #{l2_loss.1} parent=23 // pred_fallthru
          _
        // Predicated region
        $region37: #{l2_loss.1} parent=23 // pred_check
          %p373 = pneg %p69
        $region38: #{l2_loss.1} parent=23 // pred_check_branch
          %375 = sbr.rel (%p373) target = $region40
        $region39: #{l2_loss.1} parent=23 // pred_region
          %s377 = ssub.s32 16, 16
          %378 = vsyncadd [#allocation5], %s377
          %s380 = sshll.u32 [#allocation6], 4
          %s381 = int_to_ptr.vmem [resolvable:$true] %s380
          %383 = dma.vmem_to_hbm [thread:$0]  %s381, 16, %s1, [#allocation5]
        $region40: #{l2_loss.1} parent=23 // pred_fallthru
          _
        // Predicated region
        $region41: #{l2_loss.1} parent=23 // pred_check
          %p384 = pneg %p69
        $region42: #{l2_loss.1} parent=23 // pred_check_branch
          %386 = sbr.rel (%p384) target = $region44
        $region43: #{l2_loss.1} parent=23 // pred_region
          %387 = dma.done [#allocation5], 16
        $region44: #{l2_loss.1} parent=23 // pred_fallthru
          _
      $region24: #{l2_loss.1} parent=5 // pred_fallthru
        _
      %p388 = scmp.le.s32.totalorder 2, %s11
      // Predicated region
      $region45: #{l2_loss.1} parent=5 // pred_check
        %p389 = pneg %p388
      $region46: #{l2_loss.1} parent=5 // pred_check_branch
        %391 = sbr.rel (%p389) target = $region48
      $region47: #{l2_loss.1} parent=5 // pred_region
        %s392 = ssub.s32 %s11, 2
      $region48: #{l2_loss.1} parent=5 // pred_fallthru
        _
    $region6: #{l2_loss.1} parent=1 // loop_footer
      %s15 = sadd.s32 1, %s11
    $region7: #{l2_loss.1} parent=1 // loop_footer_branch
      %10 = sbr.rel target = $region3
    $region8: #{l2_loss.1} parent=1 // loop_exit
      _
    %393 = vsyncpa [#allocation4], 1
    %s394 = scalar_lea.sflag [#allocation4], 1
    %395 = vsyncpa %s394, 1
    %396 = vsyncpa [#allocation5], 1
    %s397 = scalar_lea.sflag [#allocation5], 1
    %398 = vsyncpa %s397, 1

</llo_original>
